<compile_context>
chip_gen: v5e
topology: v5e:2x2
jax: 0.10.0
libtpu: 0.0.40
codegen_flags: <defaults>
</compile_context>

<pallas_src>
import functools

import jax
import jax.numpy as jnp
from jax import lax
from jax.experimental import pallas as pl
from jax.experimental.pallas import tpu as pltpu


def _conv_im2col_kernel(x_ref, w_ref, b_ref, o_ref, *, KH, KW, W, HW, tail):
    # x_ref: (N, Cin_p, H*W)      f32 -- NCHW, spatial flattened into lanes, Cin padded to 8
    # w_ref: (Cout, KH*KW*Cin_p)  f32 -- tap-major ((kh, kw), ci) weights (padded ci cols = 0)
    # b_ref: (Cout, 1)            f32
    # o_ref: (N, Cout, H*W)       f32 -- flat spatial with full-W stride; junk columns/rows
    #                                    (wo >= Wo or ho >= Ho) are sliced off by the wrapper.
    N, Cin_p, _ = x_ref.shape
    L = N * HW                                    # batched matmul lane width (multiple of 128)

    # Lane-concatenate all images plus a zero tail that absorbs the largest tap offset.
    # (Single aligned in-kernel concat; replaces the wrapper-side jnp.pad of the old version.)
    pieces = [x_ref[n] for n in range(N)]
    if tail > 0:
        pieces.append(jnp.zeros((Cin_p, tail), dtype=x_ref.dtype))
    xz = jnp.concatenate(pieces, axis=-1)         # (Cin_p, N*HW + tail)

    # im2col: filter tap (kh, kw) is a static lane-shifted slice of xz.  Reads that cross an
    # image boundary or hit the zero tail only ever feed junk output positions (valid only
    # for stride=1, dilation=1, padding=0 -- the wrapper's contract).
    taps = []
    for kh in range(KH):
        for kw in range(KW):
            off = kh * W + kw
            taps.append(xz[:, off:off + L])       # (Cin_p, L)
    patches = jnp.concatenate(taps, axis=0)       # (KH*KW*Cin_p, L), aligned 8-sublane granules

    # ONE MXU matmul for the whole batch, f32 accumulation, bias broadcast hoisted.
    acc = jnp.dot(w_ref[...], patches, preferred_element_type=jnp.float32)  # (Cout, L)
    y = acc + b_ref[...]                          # (Cout, 1) broadcast applied once

    # Per-image stores are 256-lane-aligned slices -> unmasked stores.
    for n in range(N):
        o_ref[n] = y[:, n * HW:(n + 1) * HW].astype(o_ref.dtype)


def make_simple_net(weight_oihw, bias):
    """SimpleNet forward (Conv2d stride=1, padding=0). Weight layout prep runs ONCE here."""
    Cout, Cin, KH, KW = weight_oihw.shape
    Cin_p = ((Cin + 7) // 8) * 8                  # pad channels to a full f32 sublane granule

    # Tap-major ((kh, kw), ci) weight matrix with zero-padded ci columns -- built at init,
    # never on the per-call hot path.
    w2d = jnp.transpose(weight_oihw, (0, 2, 3, 1))                       # (Cout, KH, KW, Cin)
    w2d = jnp.pad(w2d, ((0, 0), (0, 0), (0, 0), (0, Cin_p - Cin)))       # (Cout, KH, KW, Cin_p)
    w2d = w2d.reshape(Cout, KH * KW * Cin_p)
    b2d = bias.reshape(Cout, 1)

    @jax.jit
    def forward(x_nchw):
        N, Cin_x, H, W = x_nchw.shape
        assert Cin_x == Cin, "channel mismatch"
        # The flat-lane junk-column trick below is only valid for stride=1, dilation=1,
        # padding=0 (exactly nn.Conv2d(indepth, outdepth, kernel, stride=1)).  Fail loudly
        # if the spatial config makes the valid conv degenerate.
        Ho, Wo = H - KH + 1, W - KW + 1
        assert Ho >= 1 and Wo >= 1, "kernel larger than input (padding=0 assumed)"
        HW = H * W
        off_max = (KH - 1) * W + (KW - 1)
        tail = (-(-off_max // 128) * 128) if off_max > 0 else 0          # lane-aligned zero tail

        # Only activation-side plumbing: free-ish flatten + one small channel pad.
        x_flat = x_nchw.reshape(N, Cin, HW)
        if Cin_p != Cin:
            x_flat = jnp.pad(x_flat, ((0, 0), (0, Cin_p - Cin), (0, 0)))

        kernel = functools.partial(_conv_im2col_kernel,
                                   KH=KH, KW=KW, W=W, HW=HW, tail=tail)

        flops = 2 * N * Ho * Wo * KH * KW * Cin * Cout
        bytes_accessed = 4 * (x_flat.size + w2d.size + b2d.size + N * Cout * HW)

        y_flat = pl.pallas_call(
            kernel,
            out_shape=jax.ShapeDtypeStruct((N, Cout, HW), jnp.float32),
            in_specs=[
                pl.BlockSpec(memory_space=pltpu.MemorySpace.VMEM),
                pl.BlockSpec(memory_space=pltpu.MemorySpace.VMEM),
                pl.BlockSpec(memory_space=pltpu.MemorySpace.VMEM),
            ],
            out_specs=pl.BlockSpec(memory_space=pltpu.MemorySpace.VMEM),
            cost_estimate=pl.CostEstimate(
                flops=flops, transcendentals=0, bytes_accessed=bytes_accessed),
        )(x_flat, w2d, b2d)

        # (N, Cout, H*W) is already NCHW-flat: reshape + drop the junk columns/rows.
        # TODO(synk): if the consumer can take the flat (N, Cout, H*W) layout (or a fused
        # next layer lives in this kernel), return y_flat directly and skip this slice-copy.
        return y_flat.reshape(N, Cout, H, W)[:, :, :Ho, :Wo]

    return forward


if __name__ == "__main__":
    # SimpleNet(indepth=4, outdepth=8, kernel=3)
    N, Cin, H, W = 2, 4, 16, 16
    Cout, K = 8, 3

    key = jax.random.PRNGKey(0)
    kx, kw, kb = jax.random.split(key, 3)

    x = jax.random.normal(kx, (N, Cin, H, W), dtype=jnp.float32)
    # Deterministic init mimicking nn.Conv2d default (uniform in +/- 1/sqrt(fan_in)).
    fan_in = Cin * K * K
    bound = 1.0 / (fan_in ** 0.5)
    weight = jax.random.uniform(kw, (Cout, Cin, K, K), jnp.float32, -bound, bound)
    bias = jax.random.uniform(kb, (Cout,), jnp.float32, -bound, bound)

    simple_net = make_simple_net(weight, bias)           # one-time param/layout prep
    y = jax.block_until_ready(simple_net(x))

    # Reference: XLA native conv (cross-correlation, same as torch Conv2d) PLUS bias.
    y_ref = lax.conv_general_dilated(
        x, weight, window_strides=(1, 1), padding="VALID",
        dimension_numbers=("NCHW", "OIHW", "NCHW")) + bias[None, :, None, None]

    assert y.shape == (N, Cout, H - K + 1, W - K + 1), y.shape
    err = float(jnp.abs(y - y_ref).max())
    assert jnp.allclose(y, y_ref, atol=1e-4, rtol=1e-4), err

    print("KERNEL_OK")
</pallas_src>

<mosaic_0001>
module attributes {stable_mosaic.version = 11 : i64} {
  func.func @_conv_im2col_kernel(%arg0: memref<2x8x256xf32, #tpu.memory_space<vmem>>, %arg1: memref<8x72xf32, #tpu.memory_space<vmem>>, %arg2: memref<8x1xf32, #tpu.memory_space<vmem>>, %arg3: memref<2x8x256xf32, #tpu.memory_space<vmem>>) attributes {dimension_semantics = [], scalar_prefetch = 0 : i64, scratch_operands = 0 : i64, tpu.core_type = #tpu.core_type<tc>} {
    %c0 = arith.constant 0 : index
    %c0_0 = arith.constant 0 : index
    %c0_1 = arith.constant 0 : index
    %0 = vector.load %arg0[%c0, %c0_0, %c0_1] : memref<2x8x256xf32, #tpu.memory_space<vmem>>, vector<1x8x256xf32>
    %1 = vector.shape_cast %0 : vector<1x8x256xf32> to vector<8x256xf32>
    %c1 = arith.constant 1 : index
    %c0_2 = arith.constant 0 : index
    %c0_3 = arith.constant 0 : index
    %2 = vector.load %arg0[%c1, %c0_2, %c0_3] : memref<2x8x256xf32, #tpu.memory_space<vmem>>, vector<1x8x256xf32>
    %3 = vector.shape_cast %2 : vector<1x8x256xf32> to vector<8x256xf32>
    %cst = arith.constant 0.000000e+00 : f32
    %4 = vector.broadcast %cst : f32 to vector<8x128xf32>
    %5 = tpu.concatenate %1, %3, %4 in 1 : vector<8x256xf32>, vector<8x256xf32>, vector<8x128xf32> -> vector<8x640xf32>
    %6 = vector.extract_strided_slice %5 {offsets = [0, 0], sizes = [8, 512], strides = [1, 1]} : vector<8x640xf32> to vector<8x512xf32>
    %7 = vector.extract_strided_slice %5 {offsets = [0, 1], sizes = [8, 512], strides = [1, 1]} : vector<8x640xf32> to vector<8x512xf32>
    %8 = vector.extract_strided_slice %5 {offsets = [0, 2], sizes = [8, 512], strides = [1, 1]} : vector<8x640xf32> to vector<8x512xf32>
    %9 = vector.extract_strided_slice %5 {offsets = [0, 16], sizes = [8, 512], strides = [1, 1]} : vector<8x640xf32> to vector<8x512xf32>
    %10 = vector.extract_strided_slice %5 {offsets = [0, 17], sizes = [8, 512], strides = [1, 1]} : vector<8x640xf32> to vector<8x512xf32>
    %11 = vector.extract_strided_slice %5 {offsets = [0, 18], sizes = [8, 512], strides = [1, 1]} : vector<8x640xf32> to vector<8x512xf32>
    %12 = vector.extract_strided_slice %5 {offsets = [0, 32], sizes = [8, 512], strides = [1, 1]} : vector<8x640xf32> to vector<8x512xf32>
    %13 = vector.extract_strided_slice %5 {offsets = [0, 33], sizes = [8, 512], strides = [1, 1]} : vector<8x640xf32> to vector<8x512xf32>
    %14 = vector.extract_strided_slice %5 {offsets = [0, 34], sizes = [8, 512], strides = [1, 1]} : vector<8x640xf32> to vector<8x512xf32>
    %15 = tpu.concatenate %6, %7, %8, %9, %10, %11, %12, %13, %14 in 0 : vector<8x512xf32>, vector<8x512xf32>, vector<8x512xf32>, vector<8x512xf32>, vector<8x512xf32>, vector<8x512xf32>, vector<8x512xf32>, vector<8x512xf32>, vector<8x512xf32> -> vector<72x512xf32>
    %c0_4 = arith.constant 0 : index
    %c0_5 = arith.constant 0 : index
    %16 = vector.load %arg1[%c0_4, %c0_5] : memref<8x72xf32, #tpu.memory_space<vmem>>, vector<8x72xf32>
    %cst_6 = arith.constant dense<0.000000e+00> : vector<8x512xf32>
    %17 = tpu.matmul %16, %15, %cst_6 {dimension_numbers = #tpu.dot_dimension_numbers<[1], [0], [0], [1], [0, 0, 1, 1], [], []>} : vector<8x72xf32>, vector<72x512xf32>, vector<8x512xf32> -> vector<8x512xf32>
    %c0_7 = arith.constant 0 : index
    %c0_8 = arith.constant 0 : index
    %18 = vector.load %arg2[%c0_7, %c0_8] : memref<8x1xf32, #tpu.memory_space<vmem>>, vector<8x1xf32>
    %19 = vector.broadcast %18 : vector<8x1xf32> to vector<8x512xf32>
    %20 = arith.addf %17, %19 : vector<8x512xf32>
    %21 = vector.extract_strided_slice %20 {offsets = [0, 0], sizes = [8, 256], strides = [1, 1]} : vector<8x512xf32> to vector<8x256xf32>
    %c0_9 = arith.constant 0 : index
    %c0_10 = arith.constant 0 : index
    %c0_11 = arith.constant 0 : index
    %22 = vector.load %arg3[%c0_9, %c0_10, %c0_11] : memref<2x8x256xf32, #tpu.memory_space<vmem>>, vector<1x8x256xf32>
    %23 = vector.shape_cast %22 : vector<1x8x256xf32> to vector<8x256xf32>
    %24 = vector.shape_cast %21 : vector<8x256xf32> to vector<1x8x256xf32>
    tpu.vector_store %arg3[%c0_9, %c0_10, %c0_11], %24 {strides = array<i32>} : memref<2x8x256xf32, #tpu.memory_space<vmem>>, vector<1x8x256xf32>,
    %25 = vector.extract_strided_slice %20 {offsets = [0, 256], sizes = [8, 256], strides = [1, 1]} : vector<8x512xf32> to vector<8x256xf32>
    %c1_12 = arith.constant 1 : index
    %c0_13 = arith.constant 0 : index
    %c0_14 = arith.constant 0 : index
    %26 = vector.load %arg3[%c1_12, %c0_13, %c0_14] : memref<2x8x256xf32, #tpu.memory_space<vmem>>, vector<1x8x256xf32>
    %27 = vector.shape_cast %26 : vector<1x8x256xf32> to vector<8x256xf32>
    %28 = vector.shape_cast %25 : vector<8x256xf32> to vector<1x8x256xf32>
    tpu.vector_store %arg3[%c1_12, %c0_13, %c0_14], %28 {strides = array<i32>} : memref<2x8x256xf32, #tpu.memory_space<vmem>>, vector<1x8x256xf32>,
    return
  }
}

</mosaic_0001>

<llo_original>
// kernel: forward.1
$region0: #{forward.1}
  #allocation0 [shape = 'u32[]', space=smem, size = 0x4, offset = 0x4, fixed_abs, tag = 'smem constant byte address 0x4 - core index']
  #allocation1 [shape = 'u32[72,128]{1,0:T(1,128)}', space=vmem, size = 0x9000, scoped, tag = 'internal scratch']
  %s0 = inlined_call_operand.vmem [shape: f32[2,8,256], index: 0, kind: input, shape index: {}]
  %s1 = inlined_call_operand.vmem [shape: f32[8,72], index: 1, kind: input, shape index: {}]
  %s2 = inlined_call_operand.vmem [shape: f32[8,1], index: 2, kind: input, shape index: {}]
  %s3 = inlined_call_operand.vmem [shape: f32[2,8,256], index: 3, kind: output, shape index: {}]
  %s4 = sld [smem:[#allocation0]]
  $region22: #{forward.1} parent=0
    _
  %s6 = ssub.s32 1, %s4
  %s7 = scalar_select 0, %s6, %s4
  // Predicated region
  $region2: #{forward.1} parent=0 // pred_check
    _
  $region3: #{forward.1} parent=0 // pred_check_branch
    %9 = sbr.rel (0) target = $region5
  $region4: #{forward.1} parent=0 // pred_region
    _
  $region5: #{forward.1} parent=0 // pred_fallthru
    _
  // Predicated region
  $region6: #{forward.1} parent=0 // pred_check
    _
  $region7: #{forward.1} parent=0 // pred_check_branch
    %11 = sbr.rel (0) target = $region9
  $region8: #{forward.1} parent=0 // pred_region
    _
  $region9: #{forward.1} parent=0 // pred_fallthru
    _
  // Predicated region
  $region10: #{forward.1} parent=0 // pred_check
    _
  $region11: #{forward.1} parent=0 // pred_check_branch
    %13 = sbr.rel (0) target = $region13
  $region12: #{forward.1} parent=0 // pred_region
    _
  $region13: #{forward.1} parent=0 // pred_fallthru
    _
  %v14 = vld [vmem:[%s0] sm:$0xff]
  %v15 = vld [vmem:[%s0 + $0x8] sm:$0xff]
  %s16 = scalar_lea.vmem %s0, 16
  %v17 = vld [vmem:[%s16] sm:$0xff]
  %v18 = vld [vmem:[%s16 + $0x8] sm:$0xff]
  %24 = vrot.lane.b32.xlu0 %v14, 127
  %v25 = vpop.permute.xlu0 %24
  %26 = vrot.lane.b32.xlu0 %v15, 127
  %v27 = vpop.permute.xlu0 %26
  %28 = vrot.lane.b32.xlu0 %v17, 127
  %v29 = vpop.permute.xlu0 %28
  %30 = vrot.lane.b32.xlu0 %v18, 127
  %v31 = vpop.permute.xlu0 %30
  %32 = vrot.lane.b32.xlu0 0.0, 127
  %v33 = vpop.permute.xlu0 %32
  %vm34 = vcmask 1039360
  %v35 = vsel %vm34, %v25, %v27
  %v36 = vsel %vm34, %v27, %v29
  %v37 = vsel %vm34, %v29, %v31
  %v38 = vsel %vm34, %v31, %v33
  %43 = vrot.lane.b32.xlu0 %v14, 126
  %v44 = vpop.permute.xlu0 %43
  %45 = vrot.lane.b32.xlu0 %v15, 126
  %v46 = vpop.permute.xlu0 %45
  %47 = vrot.lane.b32.xlu0 %v17, 126
  %v48 = vpop.permute.xlu0 %47
  %49 = vrot.lane.b32.xlu0 %v18, 126
  %v50 = vpop.permute.xlu0 %49
  %51 = vrot.lane.b32.xlu0 0.0, 126
  %v52 = vpop.permute.xlu0 %51
  %vm53 = vcmask 1031168
  %v54 = vsel %vm53, %v44, %v46
  %v55 = vsel %vm53, %v46, %v48
  %v56 = vsel %vm53, %v48, %v50
  %v57 = vsel %vm53, %v50, %v52
  %62 = vrot.lane.b32.xlu0 %v14, 112
  %v63 = vpop.permute.xlu0 %62
  %64 = vrot.lane.b32.xlu0 %v15, 112
  %v65 = vpop.permute.xlu0 %64
  %66 = vrot.lane.b32.xlu0 %v17, 112
  %v67 = vpop.permute.xlu0 %66
  %68 = vrot.lane.b32.xlu0 %v18, 112
  %v69 = vpop.permute.xlu0 %68
  %70 = vrot.lane.b32.xlu0 0.0, 112
  %v71 = vpop.permute.xlu0 %70
  %vm72 = vcmask 916480
  %v73 = vsel %vm72, %v63, %v65
  %v74 = vsel %vm72, %v65, %v67
  %v75 = vsel %vm72, %v67, %v69
  %v76 = vsel %vm72, %v69, %v71
  %81 = vrot.lane.b32.xlu0 %v14, 111
  %v82 = vpop.permute.xlu0 %81
  %83 = vrot.lane.b32.xlu0 %v15, 111
  %v84 = vpop.permute.xlu0 %83
  %85 = vrot.lane.b32.xlu0 %v17, 111
  %v86 = vpop.permute.xlu0 %85
  %87 = vrot.lane.b32.xlu0 %v18, 111
  %v88 = vpop.permute.xlu0 %87
  %89 = vrot.lane.b32.xlu0 0.0, 111
  %v90 = vpop.permute.xlu0 %89
  %vm91 = vcmask 908288
  %v92 = vsel %vm91, %v82, %v84
  %v93 = vsel %vm91, %v84, %v86
  %v94 = vsel %vm91, %v86, %v88
  %v95 = vsel %vm91, %v88, %v90
  %100 = vrot.lane.b32.xlu0 %v14, 110
  %v101 = vpop.permute.xlu0 %100
  %102 = vrot.lane.b32.xlu0 %v15, 110
  %v103 = vpop.permute.xlu0 %102
  %104 = vrot.lane.b32.xlu0 %v17, 110
  %v105 = vpop.permute.xlu0 %104
  %106 = vrot.lane.b32.xlu0 %v18, 110
  %v107 = vpop.permute.xlu0 %106
  %108 = vrot.lane.b32.xlu0 0.0, 110
  %v109 = vpop.permute.xlu0 %108
  %vm110 = vcmask 900096
  %v111 = vsel %vm110, %v101, %v103
  %v112 = vsel %vm110, %v103, %v105
  %v113 = vsel %vm110, %v105, %v107
  %v114 = vsel %vm110, %v107, %v109
  %119 = vrot.lane.b32.xlu0 %v14, 96
  %v120 = vpop.permute.xlu0 %119
  %121 = vrot.lane.b32.xlu0 %v15, 96
  %v122 = vpop.permute.xlu0 %121
  %123 = vrot.lane.b32.xlu0 %v17, 96
  %v124 = vpop.permute.xlu0 %123
  %125 = vrot.lane.b32.xlu0 %v18, 96
  %v126 = vpop.permute.xlu0 %125
  %127 = vrot.lane.b32.xlu0 0.0, 96
  %v128 = vpop.permute.xlu0 %127
  %vm129 = vcmask 785408
  %v130 = vsel %vm129, %v120, %v122
  %v131 = vsel %vm129, %v122, %v124
  %v132 = vsel %vm129, %v124, %v126
  %v133 = vsel %vm129, %v126, %v128
  %138 = vrot.lane.b32.xlu0 %v14, 95
  %v139 = vpop.permute.xlu0 %138
  %140 = vrot.lane.b32.xlu0 %v15, 95
  %v141 = vpop.permute.xlu0 %140
  %142 = vrot.lane.b32.xlu0 %v17, 95
  %v143 = vpop.permute.xlu0 %142
  %144 = vrot.lane.b32.xlu0 %v18, 95
  %v145 = vpop.permute.xlu0 %144
  %146 = vrot.lane.b32.xlu0 0.0, 95
  %v147 = vpop.permute.xlu0 %146
  %vm148 = vcmask 777216
  %v149 = vsel %vm148, %v139, %v141
  %v150 = vsel %vm148, %v141, %v143
  %v151 = vsel %vm148, %v143, %v145
  %v152 = vsel %vm148, %v145, %v147
  %157 = vrot.lane.b32.xlu0 %v14, 94
  %v158 = vpop.permute.xlu0 %157
  %159 = vrot.lane.b32.xlu0 %v15, 94
  %v160 = vpop.permute.xlu0 %159
  %161 = vrot.lane.b32.xlu0 %v17, 94
  %v162 = vpop.permute.xlu0 %161
  %163 = vrot.lane.b32.xlu0 %v18, 94
  %v164 = vpop.permute.xlu0 %163
  %165 = vrot.lane.b32.xlu0 0.0, 94
  %v166 = vpop.permute.xlu0 %165
  %vm167 = vcmask 769024
  %v168 = vsel %vm167, %v158, %v160
  %v169 = vsel %vm167, %v160, %v162
  %v170 = vsel %vm167, %v162, %v164
  %v171 = vsel %vm167, %v164, %v166
  %v176 = vld [vmem:[%s1] sm:$0xff]
  %v177 = vld [vmem:[%s2] sm:$0xff]
  %179 = vset.pattern.permute.xlu0 0
  %180 = vperm.xlu0 %179, %v177
  %v181 = vpop.permute.xlu0 %180
  %vm183 = vcmask 588800
  %v185 = vsel %vm183, %v176, 0
  %187 = vmatpush.msra.mxu0 0.0
  %188 = vmatpush.msra.mxu0 0.0
  %189 = vmatpush.msra.mxu0 0.0
  %190 = vmatpush.msra.mxu0 0.0
  %191 = vmatpush.msra.mxu0 0.0
  %192 = vmatpush.msra.mxu0 0.0
  %193 = vmatpush.msra.mxu0 0.0
  %194 = vmatpush.msra.mxu0 %v168
  %195 = vmatpush.msra.mxu0 %v149
  %196 = vmatpush.msra.mxu0 %v130
  %197 = vmatpush.msra.mxu0 %v111
  %198 = vmatpush.msra.mxu0 %v92
  %199 = vmatpush.msra.mxu0 %v73
  %200 = vmatpush.msra.mxu0 %v54
  %201 = vmatpush.msra.mxu0 %v35
  %202 = vmatpush.msra.mxu0 %v14
  %203 = vmatmul.f32.gmra.mxu0 %v185
  %v204 = vpop.f32.mrf.mxu0
  %v205 = vadd.f32 %v181, %v204
  %206 = vdwg.mxu0
  %207 = vmatpush.msra.mxu0 0.0
  %208 = vmatpush.msra.mxu0 0.0
  %209 = vmatpush.msra.mxu0 0.0
  %210 = vmatpush.msra.mxu0 0.0
  %211 = vmatpush.msra.mxu0 0.0
  %212 = vmatpush.msra.mxu0 0.0
  %213 = vmatpush.msra.mxu0 0.0
  %214 = vmatpush.msra.mxu0 %v169
  %215 = vmatpush.msra.mxu0 %v150
  %216 = vmatpush.msra.mxu0 %v131
  %217 = vmatpush.msra.mxu0 %v112
  %218 = vmatpush.msra.mxu0 %v93
  %219 = vmatpush.msra.mxu0 %v74
  %220 = vmatpush.msra.mxu0 %v55
  %221 = vmatpush.msra.mxu0 %v36
  %222 = vmatpush.msra.mxu0 %v15
  %223 = vmatmul.f32.gmra.mxu0 %v185
  %v224 = vpop.f32.mrf.mxu0
  %v225 = vadd.f32 %v181, %v224
  %226 = vdwg.mxu0
  %227 = vmatpush.msra.mxu0 0.0
  %228 = vmatpush.msra.mxu0 0.0
  %229 = vmatpush.msra.mxu0 0.0
  %230 = vmatpush.msra.mxu0 0.0
  %231 = vmatpush.msra.mxu0 0.0
  %232 = vmatpush.msra.mxu0 0.0
  %233 = vmatpush.msra.mxu0 0.0
  %234 = vmatpush.msra.mxu0 %v170
  %235 = vmatpush.msra.mxu0 %v151
  %236 = vmatpush.msra.mxu0 %v132
  %237 = vmatpush.msra.mxu0 %v113
  %238 = vmatpush.msra.mxu0 %v94
  %239 = vmatpush.msra.mxu0 %v75
  %240 = vmatpush.msra.mxu0 %v56
  %241 = vmatpush.msra.mxu0 %v37
  %242 = vmatpush.msra.mxu0 %v17
  %243 = vmatmul.f32.gmra.mxu0 %v185
  %v244 = vpop.f32.mrf.mxu0
  %v245 = vadd.f32 %v181, %v244
  %246 = vdwg.mxu0
  %247 = vmatpush.msra.mxu0 0.0
  %248 = vmatpush.msra.mxu0 0.0
  %249 = vmatpush.msra.mxu0 0.0
  %250 = vmatpush.msra.mxu0 0.0
  %251 = vmatpush.msra.mxu0 0.0
  %252 = vmatpush.msra.mxu0 0.0
  %253 = vmatpush.msra.mxu0 0.0
  %254 = vmatpush.msra.mxu0 %v171
  %255 = vmatpush.msra.mxu0 %v152
  %256 = vmatpush.msra.mxu0 %v133
  %257 = vmatpush.msra.mxu0 %v114
  %258 = vmatpush.msra.mxu0 %v95
  %259 = vmatpush.msra.mxu0 %v76
  %260 = vmatpush.msra.mxu0 %v57
  %261 = vmatpush.msra.mxu0 %v38
  %262 = vmatpush.msra.mxu0 %v18
  %263 = vmatmul.f32.gmra.mxu0 %v185
  %v264 = vpop.f32.mrf.mxu0
  %v265 = vadd.f32 %v181, %v264
  %266 = vdwg.mxu0
  %267 = vst [vmem:[%s3] sm:$0xff] %v205
  %268 = vst [vmem:[%s3 + $0x8] sm:$0xff] %v225
  %s269 = scalar_lea.vmem %s3, 16
  %270 = vst [vmem:[%s269] sm:$0xff] %v245
  %271 = vst [vmem:[%s269 + $0x8] sm:$0xff] %v265
  // Predicated region
  $region14: #{forward.1} parent=0 // pred_check
    _
  $region15: #{forward.1} parent=0 // pred_check_branch
    %273 = sbr.rel (0) target = $region17
  $region16: #{forward.1} parent=0 // pred_region
    _
  $region17: #{forward.1} parent=0 // pred_fallthru
    _
  // Predicated region
  $region18: #{forward.1} parent=0 // pred_check
    _
  $region19: #{forward.1} parent=0 // pred_check_branch
    %275 = sbr.rel (0) target = $region21
  $region20: #{forward.1} parent=0 // pred_region
    _
  $region21: #{forward.1} parent=0 // pred_fallthru
    _

</llo_original>
